<compile_context>
chip_gen: v6e
topology: v6e:2x2x1
jax: 0.10.0
libtpu: 0.0.40
codegen_flags: <defaults>
</compile_context>

<pallas_src>
import jax
import jax.numpy as jnp
import numpy as np
from jax.experimental import pallas as pl
from jax.experimental.pallas import tpu as pltpu

# ---- problem sizes (small, consistent with the module) ----
B    = 2      # batch
S    = 8      # sequence length
D_H  = 32     # model dim (d_h)
D_FF = 64     # feed-forward hidden dim (d_ff)

# ---- lane-dense padded sizes (multiples of the 128-lane vreg width) ----
DH_PAD  = 128
DFF_PAD = 128


# ---------------------------------------------------------------------------
# Pallas kernel: single invocation, whole (stacked, padded) batch + fused
# weight+bias slabs all resident in VMEM.
# ---------------------------------------------------------------------------
def ffn_kernel(x_ref, w1_ref, w2_ref, o_ref):
    # x_ref:  [M, DH_PAD]   bf16  (column D_H holds the constant-1 marker)
    # w1_ref: [DH_PAD, DFF_PAD] bf16 (row D_H holds b1; [D_H, D_FF] holds 1.0)
    # w2_ref: [DFF_PAD, DH_PAD] bf16 (row D_FF holds b2)
    # o_ref:  [M, DH_PAD]   f32
    h = jnp.dot(x_ref[...], w1_ref[...], preferred_element_type=jnp.float32)
    h = jnp.maximum(h, 0.0)  # ReLU (bias already folded in via the marker column)
    # TODO(synk): nn.Dropout is identity in eval mode; a training-mode version
    # would need pltpu.prng_seed / prng_random_bits masking here.
    y = jnp.dot(h.astype(jnp.bfloat16), w2_ref[...],
                preferred_element_type=jnp.float32)
    o_ref[...] = y.astype(o_ref.dtype)


def build_aug_weights(w1, b1, w2, b2, dtype=jnp.bfloat16):
    """Fold biases into zero-padded, lane-dense weight slabs (done once)."""
    w1_aug = jnp.zeros((DH_PAD, DFF_PAD), jnp.float32)
    w1_aug = w1_aug.at[:D_H, :D_FF].set(w1)
    w1_aug = w1_aug.at[D_H, :D_FF].set(b1)      # bias row (hit by x marker col)
    w1_aug = w1_aug.at[D_H, D_FF].set(1.0)      # propagates the 1-marker to h

    w2_aug = jnp.zeros((DFF_PAD, DH_PAD), jnp.float32)
    w2_aug = w2_aug.at[:D_FF, :D_H].set(w2)
    w2_aug = w2_aug.at[D_FF, :D_H].set(b2)      # bias row (hit by h marker col)
    return w1_aug.astype(dtype), w2_aug.astype(dtype)


def feed_forward_block(x, w1_aug, w2_aug):
    # x: [B, S, D_H] -> stack batch+seq into one [B*S, DH_PAD] bf16 slab with a
    # constant-1 marker column at index D_H (homogeneous-coordinate bias trick).
    b_, s_, dh = x.shape
    m = b_ * s_
    x2d = x.reshape(m, dh).astype(jnp.bfloat16)
    x_pad = jnp.zeros((m, DH_PAD), jnp.bfloat16)
    x_pad = x_pad.at[:, :dh].set(x2d)
    x_pad = x_pad.at[:, dh].set(jnp.bfloat16(1.0))

    flops = 2 * m * DH_PAD * DFF_PAD + 2 * m * DFF_PAD * DH_PAD
    bytes_accessed = (x_pad.size * 2 + w1_aug.size * 2 + w2_aug.size * 2
                      + m * DH_PAD * 4)

    vmem_specs = [pl.BlockSpec(memory_space=pltpu.MemorySpace.VMEM)
                  for _ in range(3)]
    out_pad = pl.pallas_call(
        ffn_kernel,
        out_shape=jax.ShapeDtypeStruct((m, DH_PAD), jnp.float32),
        in_specs=vmem_specs,
        out_specs=pl.BlockSpec(memory_space=pltpu.MemorySpace.VMEM),
        cost_estimate=pl.CostEstimate(flops=flops, transcendentals=0,
                                      bytes_accessed=bytes_accessed),
    )(x_pad, w1_aug, w2_aug)
    return out_pad[:, :dh].reshape(b_, s_, dh).astype(x.dtype)


# ---------------------------------------------------------------------------
# pure-JAX f32 reference (same math, no Pallas) for a correctness check
# ---------------------------------------------------------------------------
def feed_forward_reference(x, w1, b1, w2, b2):
    h = jnp.maximum(jnp.einsum("bsd,df->bsf", x, w1) + b1, 0.0)
    return jnp.einsum("bsf,fd->bsd", h, w2) + b2


def make_params(key):
    k1, k2, k3, k4 = jax.random.split(key, 4)
    scale = 0.1
    # stored as [in, out]  (i.e. torch.nn.Linear.weight transposed)
    w1 = scale * jax.random.normal(k1, (D_H, D_FF), jnp.float32)
    b1 = scale * jax.random.normal(k2, (D_FF,), jnp.float32)
    w2 = scale * jax.random.normal(k3, (D_FF, D_H), jnp.float32)
    b2 = scale * jax.random.normal(k4, (D_H,), jnp.float32)
    return w1, b1, w2, b2


if __name__ == "__main__":
    key = jax.random.PRNGKey(0)
    kx, kp = jax.random.split(key, 2)

    x = jax.random.normal(kx, (B, S, D_H), jnp.float32)
    w1, b1, w2, b2 = make_params(kp)

    # Build the fused, padded bf16 weight slabs once (would be reused across
    # calls in a real model; avoids re-padding / re-DMAing biases per call).
    w1_aug, w2_aug = build_aug_weights(w1, b1, w2, b2)

    out = feed_forward_block(x, w1_aug, w2_aug)
    out = jax.block_until_ready(out)

    ref = feed_forward_reference(x, w1, b1, w2, b2)
    ref = jax.block_until_ready(ref)

    # bf16 operands with f32 accumulation -> loosened tolerance per review.
    np.testing.assert_allclose(np.asarray(out), np.asarray(ref),
                               rtol=2e-2, atol=2e-2)
    print("KERNEL_OK")
</pallas_src>

<mosaic_0001>
module attributes {stable_mosaic.version = 11 : i64} {
  func.func @ffn_kernel(%arg0: memref<16x128xbf16, #tpu.memory_space<vmem>>, %arg1: memref<128x128xbf16, #tpu.memory_space<vmem>>, %arg2: memref<128x128xbf16, #tpu.memory_space<vmem>>, %arg3: memref<16x128xf32, #tpu.memory_space<vmem>>) attributes {dimension_semantics = [], scalar_prefetch = 0 : i64, scratch_operands = 0 : i64, tpu.core_type = #tpu.core_type<tc>} {
    %c0 = arith.constant 0 : index
    %c0_0 = arith.constant 0 : index
    %0 = vector.load %arg0[%c0, %c0_0] : memref<16x128xbf16, #tpu.memory_space<vmem>>, vector<16x128xbf16>
    %c0_1 = arith.constant 0 : index
    %c0_2 = arith.constant 0 : index
    %1 = vector.load %arg1[%c0_1, %c0_2] : memref<128x128xbf16, #tpu.memory_space<vmem>>, vector<128x128xbf16>
    %cst = arith.constant dense<0.000000e+00> : vector<16x128xf32>
    %2 = tpu.matmul %0, %1, %cst {dimension_numbers = #tpu.dot_dimension_numbers<[1], [0], [0], [1], [0, 0, 1, 1], [], []>} : vector<16x128xbf16>, vector<128x128xbf16>, vector<16x128xf32> -> vector<16x128xf32>
    %cst_3 = arith.constant 0.000000e+00 : f32
    %3 = vector.broadcast %cst_3 : f32 to vector<16x128xf32>
    %4 = arith.maximumf %2, %3 : vector<16x128xf32>
    %5 = arith.truncf %4 : vector<16x128xf32> to vector<16x128xbf16>
    %c0_4 = arith.constant 0 : index
    %c0_5 = arith.constant 0 : index
    %6 = vector.load %arg2[%c0_4, %c0_5] : memref<128x128xbf16, #tpu.memory_space<vmem>>, vector<128x128xbf16>
    %cst_6 = arith.constant dense<0.000000e+00> : vector<16x128xf32>
    %7 = tpu.matmul %5, %6, %cst_6 {dimension_numbers = #tpu.dot_dimension_numbers<[1], [0], [0], [1], [0, 0, 1, 1], [], []>} : vector<16x128xbf16>, vector<128x128xbf16>, vector<16x128xf32> -> vector<16x128xf32>
    %c0_7 = arith.constant 0 : index
    %c0_8 = arith.constant 0 : index
    %8 = vector.load %arg3[%c0_7, %c0_8] : memref<16x128xf32, #tpu.memory_space<vmem>>, vector<16x128xf32>
    tpu.vector_store %arg3[%c0_7, %c0_8], %7 {strides = array<i32>} : memref<16x128xf32, #tpu.memory_space<vmem>>, vector<16x128xf32>,
    return
  }
}

</mosaic_0001>

<llo_original>
// kernel: tpu_custom_call.1
$region0: #{tpu_custom_call.1}
  #allocation0 [shape = 'u32[]', space=smem, size = 0x4, offset = 0x4, fixed_abs, tag = 'smem constant byte address 0x4 - core index']
  #allocation1 [shape = 'u32[144,128]{1,0:T(1,128)}', space=vmem, size = 0x12000, scoped, tag = 'internal scratch']
  %s0 = inlined_call_operand.hbm [shape: bf16[16,128], index: 0, kind: input, shape index: {}]
  %s1 = inlined_call_operand.hbm [shape: bf16[128,128], index: 1, kind: input, shape index: {}]
  %s2 = inlined_call_operand.hbm [shape: bf16[128,128], index: 2, kind: input, shape index: {}]
  %s3 = inlined_call_operand.hbm [shape: f32[16,128], index: 3, kind: output, shape index: {}]
  %s4 = sld [smem:[#allocation0]]
  $region34: #{tpu_custom_call.1} parent=0
    _
  %s6 = ssub.s32 1, %s4
  %s7 = scalar_select 0, %s6, %s4
  $region1: #{tpu_custom_call.1} parent=0
    #allocation2 [shape = 'u8[4096]{0}', space=vmem, size = 0x1000, scoped, tag = 'input window, operand 0, single buffered']
    #allocation3 [shape = 's32[1]{0}', space=sflag, size = 0x4, scoped, tag = 'scoped memory for tpu_custom_call.1']
    #allocation4 [shape = 's32[1]{0}', space=sflag, size = 0x4, scoped, tag = 'scoped memory for tpu_custom_call.1']
    #allocation5 [shape = 'u8[32768]{0}', space=vmem, size = 0x8000, scoped, tag = 'input window, operand 1, single buffered']
    #allocation6 [shape = 's32[1]{0}', space=sflag, size = 0x4, scoped, tag = 'scoped memory for tpu_custom_call.1']
    #allocation7 [shape = 'u8[32768]{0}', space=vmem, size = 0x8000, scoped, tag = 'input window, operand 2, single buffered']
    #allocation8 [shape = 'u8[8192]{0}', space=vmem, size = 0x2000, scoped, tag = 'output window, operand 0, single buffered']
    %8 = vsyncpa [#allocation3], 0
    %9 = vsyncpa [#allocation6], 0
    %10 = vsyncpa [#allocation4], 0
    // Predicated region
    $region2: #{tpu_custom_call.1} parent=1 // pred_check
      _
    $region3: #{tpu_custom_call.1} parent=1 // pred_check_branch
      %12 = sbr.rel (0) target = $region5
    $region4: #{tpu_custom_call.1} parent=1 // pred_region
      %s14 = ssub.s32 128, 128
      %15 = vsyncadd [#allocation3], %s14
      %s16 = sshll.u32 [#allocation2], 4
      %s17 = int_to_ptr.vmem [resolvable:$true] %s16
      %22 = dma.hbm_to_vmem [thread:$0]  %s0, 128, %s17, [#allocation3], 64, 64, 4
    $region5: #{tpu_custom_call.1} parent=1 // pred_fallthru
      _
    // Predicated region
    $region6: #{tpu_custom_call.1} parent=1 // pred_check
      _
    $region7: #{tpu_custom_call.1} parent=1 // pred_check_branch
      %24 = sbr.rel (0) target = $region9
    $region8: #{tpu_custom_call.1} parent=1 // pred_region
      %s26 = ssub.s32 1024, 1024
      %27 = vsyncadd [#allocation6], %s26
      %s28 = sshll.u32 [#allocation5], 4
      %s29 = int_to_ptr.vmem [resolvable:$true] %s28
      %34 = dma.hbm_to_vmem [thread:$0]  %s1, 1024, %s29, [#allocation6], 64, 64, 4
    $region9: #{tpu_custom_call.1} parent=1 // pred_fallthru
      _
    // Predicated region
    $region10: #{tpu_custom_call.1} parent=1 // pred_check
      _
    $region11: #{tpu_custom_call.1} parent=1 // pred_check_branch
      %36 = sbr.rel (0) target = $region13
    $region12: #{tpu_custom_call.1} parent=1 // pred_region
      %s38 = ssub.s32 1024, 1024
      %39 = vsyncadd [#allocation6], %s38
      %s40 = sshll.u32 [#allocation7], 4
      %s41 = int_to_ptr.vmem [resolvable:$true] %s40
      %46 = dma.hbm_to_vmem [thread:$0]  %s2, 1024, %s41, [#allocation6], 64, 64, 4
    $region13: #{tpu_custom_call.1} parent=1 // pred_fallthru
      _
    // Predicated region
    $region14: #{tpu_custom_call.1} parent=1 // pred_check
      _
    $region15: #{tpu_custom_call.1} parent=1 // pred_check_branch
      %48 = sbr.rel (0) target = $region17
    $region16: #{tpu_custom_call.1} parent=1 // pred_region
      %49 = dma.done [#allocation3], 128
    $region17: #{tpu_custom_call.1} parent=1 // pred_fallthru
      _
    // Predicated region
    $region18: #{tpu_custom_call.1} parent=1 // pred_check
      _
    $region19: #{tpu_custom_call.1} parent=1 // pred_check_branch
      %51 = sbr.rel (0) target = $region21
    $region20: #{tpu_custom_call.1} parent=1 // pred_region
      %52 = dma.done [#allocation6], 1024
    $region21: #{tpu_custom_call.1} parent=1 // pred_fallthru
      _
    // Predicated region
    $region22: #{tpu_custom_call.1} parent=1 // pred_check
      _
    $region23: #{tpu_custom_call.1} parent=1 // pred_check_branch
      %54 = sbr.rel (0) target = $region25
    $region24: #{tpu_custom_call.1} parent=1 // pred_region
      %55 = dma.done [#allocation6], 1024
    $region25: #{tpu_custom_call.1} parent=1 // pred_fallthru
      _
    %v57 = vld [vmem:[#allocation2] sm:$0xf]
    %v58 = vld [vmem:[#allocation2 + $0x4] sm:$0xf]
    %v59 = vld [vmem:[#allocation5] sm:$0xf]
    %v60 = vld [vmem:[#allocation5 + $0x4] sm:$0xf]
    %v61 = vld [vmem:[#allocation5 + $0x8] sm:$0xf]
    %v62 = vld [vmem:[#allocation5 + $0xc] sm:$0xf]
    %v63 = vld [vmem:[#allocation5 + $0x10] sm:$0xf]
    %v64 = vld [vmem:[#allocation5 + $0x14] sm:$0xf]
    %v65 = vld [vmem:[#allocation5 + $0x18] sm:$0xf]
    %v66 = vld [vmem:[#allocation5 + $0x1c] sm:$0xf]
    %v67 = vld [vmem:[#allocation5 + $0x20] sm:$0xf]
    %v68 = vld [vmem:[#allocation5 + $0x24] sm:$0xf]
    %v69 = vld [vmem:[#allocation5 + $0x28] sm:$0xf]
    %v70 = vld [vmem:[#allocation5 + $0x2c] sm:$0xf]
    %v71 = vld [vmem:[#allocation5 + $0x30] sm:$0xf]
    %v72 = vld [vmem:[#allocation5 + $0x34] sm:$0xf]
    %v73 = vld [vmem:[#allocation5 + $0x38] sm:$0xf]
    %v74 = vld [vmem:[#allocation5 + $0x3c] sm:$0xf]
    %v77 = vunpack.c.l.b16 %v57
    %v78 = vunpack.c.l.b16 %v58
    %v79 = vpack.c.b16 %v78, %v77
    %v97 = vunpack.c.l.b16 %v59
    %v98 = vunpack.c.l.b16 %v60
    %v99 = vunpack.c.l.b16 %v61
    %v100 = vunpack.c.l.b16 %v62
    %v101 = vunpack.c.l.b16 %v63
    %v102 = vunpack.c.l.b16 %v64
    %v103 = vunpack.c.l.b16 %v65
    %v104 = vunpack.c.l.b16 %v66
    %v105 = vunpack.c.l.b16 %v67
    %v106 = vunpack.c.l.b16 %v68
    %v107 = vunpack.c.l.b16 %v69
    %v108 = vunpack.c.l.b16 %v70
    %v109 = vunpack.c.l.b16 %v71
    %v110 = vunpack.c.l.b16 %v72
    %v111 = vunpack.c.l.b16 %v73
    %v112 = vunpack.c.l.b16 %v74
    %v113 = vpack.c.b16 %v98, %v97
    %v114 = vpack.c.b16 %v100, %v99
    %v115 = vpack.c.b16 %v102, %v101
    %v116 = vpack.c.b16 %v104, %v103
    %v117 = vpack.c.b16 %v106, %v105
    %v118 = vpack.c.b16 %v108, %v107
    %v119 = vpack.c.b16 %v110, %v109
    %v120 = vpack.c.b16 %v112, %v111
    %129 = vmatprep.subr.bf16.mxu0 0
    %130 = vmatpush1.bf16.msra.mxu0 %v120
    %131 = vmatprep.subr.bf16.mxu0 0
    %132 = vmatpush1.bf16.msra.mxu0 %v119
    %133 = vmatprep.subr.bf16.mxu0 0
    %134 = vmatpush1.bf16.msra.mxu0 %v118
    %135 = vmatprep.subr.bf16.mxu0 0
    %136 = vmatpush1.bf16.msra.mxu0 %v117
    %137 = vmatprep.subr.bf16.mxu0 0
    %138 = vmatpush1.bf16.msra.mxu0 %v116
    %139 = vmatprep.subr.bf16.mxu0 0
    %140 = vmatpush1.bf16.msra.mxu0 %v115
    %141 = vmatprep.subr.bf16.mxu0 0
    %142 = vmatpush1.bf16.msra.mxu0 %v114
    %143 = vmatprep.subr.bf16.mxu0 0
    %144 = vmatpush1.bf16.msra.mxu0 %v113
    %145 = vmatprep.subr.bf16.mxu0 0
    %146 = vmatpush2.bf16.msra.mxu0 0
    %147 = vmatprep.subr.bf16.mxu0 0
    %148 = vmatpush2.bf16.msra.mxu0 0
    %149 = vmatprep.subr.bf16.mxu0 0
    %150 = vmatpush2.bf16.msra.mxu0 0
    %151 = vmatprep.subr.bf16.mxu0 0
    %152 = vmatpush2.bf16.msra.mxu0 0
    %153 = vmatprep.subr.bf16.mxu0 0
    %154 = vmatpush2.bf16.msra.mxu0 0
    %155 = vmatprep.subr.bf16.mxu0 0
    %156 = vmatpush2.bf16.msra.mxu0 0
    %157 = vmatprep.subr.bf16.mxu0 0
    %158 = vmatpush2.bf16.msra.mxu0 0
    %159 = vmatprep.subr.bf16.mxu0 0
    %160 = vmatpush2.bf16.msra.mxu0 0
    %161 = vmatprep.mubr.bf16.mxu0 0
    %162 = vmatmul.mubr.bf16.gmra.mxu0 %v79
    %v163 = vpop.f32.mrf.mxu0
    %v164 = vadd.f32 0.0, %v163
    %v165 = vpop.f32.mrf.mxu0
    %v166 = vpop.f32.mrf.mxu0
    %v167 = vadd.f32 0.0, %v166
    %v168 = vpop.f32.mrf.mxu0
    %169 = vdwg.mxu0
    %v170 = vmax.f32 %v164, 0.0
    %v171 = vmax.f32 %v167, 0.0
    %v172 = vpack.c.bf16 %v171, %v170
    %v173 = vld [vmem:[#allocation7] sm:$0xf]
    %v174 = vld [vmem:[#allocation7 + $0x4] sm:$0xf]
    %v175 = vld [vmem:[#allocation7 + $0x8] sm:$0xf]
    %v176 = vld [vmem:[#allocation7 + $0xc] sm:$0xf]
    %v177 = vld [vmem:[#allocation7 + $0x10] sm:$0xf]
    %v178 = vld [vmem:[#allocation7 + $0x14] sm:$0xf]
    %v179 = vld [vmem:[#allocation7 + $0x18] sm:$0xf]
    %v180 = vld [vmem:[#allocation7 + $0x1c] sm:$0xf]
    %v181 = vld [vmem:[#allocation7 + $0x20] sm:$0xf]
    %v182 = vld [vmem:[#allocation7 + $0x24] sm:$0xf]
    %v183 = vld [vmem:[#allocation7 + $0x28] sm:$0xf]
    %v184 = vld [vmem:[#allocation7 + $0x2c] sm:$0xf]
    %v185 = vld [vmem:[#allocation7 + $0x30] sm:$0xf]
    %v186 = vld [vmem:[#allocation7 + $0x34] sm:$0xf]
    %v187 = vld [vmem:[#allocation7 + $0x38] sm:$0xf]
    %v188 = vld [vmem:[#allocation7 + $0x3c] sm:$0xf]
    %v205 = vunpack.c.l.b16 %v173
    %v206 = vunpack.c.l.b16 %v174
    %v207 = vunpack.c.l.b16 %v175
    %v208 = vunpack.c.l.b16 %v176
    %v209 = vunpack.c.l.b16 %v177
    %v210 = vunpack.c.l.b16 %v178
    %v211 = vunpack.c.l.b16 %v179
    %v212 = vunpack.c.l.b16 %v180
    %v213 = vunpack.c.l.b16 %v181
    %v214 = vunpack.c.l.b16 %v182
    %v215 = vunpack.c.l.b16 %v183
    %v216 = vunpack.c.l.b16 %v184
    %v217 = vunpack.c.l.b16 %v185
    %v218 = vunpack.c.l.b16 %v186
    %v219 = vunpack.c.l.b16 %v187
    %v220 = vunpack.c.l.b16 %v188
    %v221 = vpack.c.b16 %v206, %v205
    %v222 = vpack.c.b16 %v208, %v207
    %v223 = vpack.c.b16 %v210, %v209
    %v224 = vpack.c.b16 %v212, %v211
    %v225 = vpack.c.b16 %v214, %v213
    %v226 = vpack.c.b16 %v216, %v215
    %v227 = vpack.c.b16 %v218, %v217
    %v228 = vpack.c.b16 %v220, %v219
    %237 = vmatprep.subr.bf16.mxu0 0
    %238 = vmatpush1.bf16.msra.mxu0 %v228
    %239 = vmatprep.subr.bf16.mxu0 0
    %240 = vmatpush1.bf16.msra.mxu0 %v227
    %241 = vmatprep.subr.bf16.mxu0 0
    %242 = vmatpush1.bf16.msra.mxu0 %v226
    %243 = vmatprep.subr.bf16.mxu0 0
    %244 = vmatpush1.bf16.msra.mxu0 %v225
    %245 = vmatprep.subr.bf16.mxu0 0
    %246 = vmatpush1.bf16.msra.mxu0 %v224
    %247 = vmatprep.subr.bf16.mxu0 0
    %248 = vmatpush1.bf16.msra.mxu0 %v223
    %249 = vmatprep.subr.bf16.mxu0 0
    %250 = vmatpush1.bf16.msra.mxu0 %v222
    %251 = vmatprep.subr.bf16.mxu0 0
    %252 = vmatpush1.bf16.msra.mxu0 %v221
    %253 = vmatprep.subr.bf16.mxu0 0
    %254 = vmatpush2.bf16.msra.mxu0 0
    %255 = vmatprep.subr.bf16.mxu0 0
    %256 = vmatpush2.bf16.msra.mxu0 0
    %257 = vmatprep.subr.bf16.mxu0 0
    %258 = vmatpush2.bf16.msra.mxu0 0
    %259 = vmatprep.subr.bf16.mxu0 0
    %260 = vmatpush2.bf16.msra.mxu0 0
    %261 = vmatprep.subr.bf16.mxu0 0
    %262 = vmatpush2.bf16.msra.mxu0 0
    %263 = vmatprep.subr.bf16.mxu0 0
    %264 = vmatpush2.bf16.msra.mxu0 0
    %265 = vmatprep.subr.bf16.mxu0 0
    %266 = vmatpush2.bf16.msra.mxu0 0
    %267 = vmatprep.subr.bf16.mxu0 0
    %268 = vmatpush2.bf16.msra.mxu0 0
    %269 = vmatprep.mubr.bf16.mxu0 0
    %270 = vmatmul.mubr.bf16.gmra.mxu0 %v172
    %v271 = vpop.f32.mrf.mxu0
    %v272 = vadd.f32 0.0, %v271
    %v273 = vpop.f32.mrf.mxu0
    %v274 = vpop.f32.mrf.mxu0
    %v275 = vadd.f32 0.0, %v274
    %v276 = vpop.f32.mrf.mxu0
    %277 = vdwg.mxu0
    %278 = vst [vmem:[#allocation8] sm:$0xff] %v272
    %279 = vst [vmem:[#allocation8 + $0x8] sm:$0xff] %v275
    // Predicated region
    $region26: #{tpu_custom_call.1} parent=1 // pred_check
      _
    $region27: #{tpu_custom_call.1} parent=1 // pred_check_branch
      %281 = sbr.rel (0) target = $region29
    $region28: #{tpu_custom_call.1} parent=1 // pred_region
      %s283 = ssub.s32 256, 256
      %284 = vsyncadd [#allocation4], %s283
      %s285 = sshll.u32 [#allocation8], 4
      %s286 = int_to_ptr.vmem [resolvable:$true] %s285
      %291 = dma.vmem_to_hbm [thread:$0]  %s286, 256, %s3, [#allocation4], 128, 128, 8
    $region29: #{tpu_custom_call.1} parent=1 // pred_fallthru
      _
    // Predicated region
    $region30: #{tpu_custom_call.1} parent=1 // pred_check
      _
    $region31: #{tpu_custom_call.1} parent=1 // pred_check_branch
      %293 = sbr.rel (0) target = $region33
    $region32: #{tpu_custom_call.1} parent=1 // pred_region
      %294 = dma.done [#allocation4], 256
    $region33: #{tpu_custom_call.1} parent=1 // pred_fallthru
      _
    %295 = vsyncpa [#allocation3], 1
    %296 = vsyncpa [#allocation6], 1
    %297 = vsyncpa [#allocation4], 1

</llo_original>
